<compile_context>
chip_gen: v6e
topology: v6e:2x2x1
jax: 0.10.0
libtpu: 0.0.40
codegen_flags: <defaults>
</compile_context>

<pallas_src>
import functools

import jax
import jax.numpy as jnp
from jax.experimental import pallas as pl
from jax.experimental.pallas import tpu as pltpu


def rnn_seq_kernel(x_ref,        # (1, Bp, I)   step-t input (streamed)
                   h0_ref,       # (Bp, H)      initial hidden (read at t==0)
                   w_in_ref,     # (I, H+O)     fused [w_ih | w_io], input rows
                   w_hid_ref,    # (H, H+O)     fused [w_ih | w_io], hidden rows
                   b_ho_ref,     # (1, H+O)     fused [b_ih | b_io]
                   w_oo_ref,     # (H+O, O)     o2o weight (in, out)
                   b_oo_ref,     # (1, O)       o2o bias
                   out_ref,      # (1, Bp, H+O) [log_probs | hidden_new] per step
                   h_scratch,    # (Bp, H)      VMEM carry of the hidden state
                   *, hidden_size, output_size):
    t = pl.program_id(0)

    @pl.when(t == 0)
    def _():
        h_scratch[...] = h0_ref[...]

    x = x_ref[0]            # (Bp, I)
    h = h_scratch[...]      # (Bp, H)

    # Fused i2h/i2o: ho == cat([hidden_new, output1], dim=1), computed as a
    # split matmul so no activation concat is needed (language width is 0).
    ho = (jnp.dot(x, w_in_ref[...], preferred_element_type=jnp.float32)
          + jnp.dot(h, w_hid_ref[...], preferred_element_type=jnp.float32)
          + b_ho_ref[...])

    # o2o directly on the fused intermediate (it already IS cat([hidden, output])).
    o2 = jnp.dot(ho, w_oo_ref[...], preferred_element_type=jnp.float32) + b_oo_ref[...]

    # dropout(p=0.1): identity (eval mode)

    # log_softmax over dim=1 (numerically stable; exp/log on EUP, reductions on XLU)
    m = jnp.max(o2, axis=1, keepdims=True)
    z = o2 - m
    lse = jnp.log(jnp.sum(jnp.exp(z), axis=1, keepdims=True))

    h_new = ho[:, :hidden_size]
    h_scratch[...] = h_new

    # Single combined per-step slab: lanes [0,O) = log_probs, [O,O+H) = hidden_new.
    out_ref[0, :, :output_size] = z - lse
    out_ref[0, :, output_size:] = h_new


def rnn_forward_seq(language, inputs, hidden0, params):
    """Run T fused RNN steps in a single pallas_call.

    language: (B, 0)      (n_languages == 0 in the original module)
    inputs:   (T, B, I)
    hidden0:  (B, H)
    returns:  (log_probs (T, B, O), final hidden (B, H))
    """
    w_in, w_hid, b_ho, w_oo, b_oo = params
    T, B, I = inputs.shape
    H = w_hid.shape[0]
    O = w_oo.shape[1]
    HO = H + O
    # n_languages == 0 in the spec -> the zero-width language tensor contributes
    # nothing to the matmuls, so it is not passed into the kernel.
    assert language.shape[1] == 0

    # Pad batch to a multiple of 8 (sublane density); padded rows are independent.
    Bp = max(8, ((B + 7) // 8) * 8)
    pad = Bp - B
    if pad:
        inputs = jnp.pad(inputs, ((0, 0), (0, pad), (0, 0)))
        hidden0 = jnp.pad(hidden0, ((0, pad), (0, 0)))

    def resident(shape):
        # Whole-array block, constant index_map -> fetched once, stays in VMEM.
        return pl.BlockSpec(shape, lambda t, _n=len(shape): (0,) * _n)

    kernel = functools.partial(rnn_seq_kernel, hidden_size=H, output_size=O)

    out_comb = pl.pallas_call(
        kernel,
        grid=(T,),
        in_specs=[
            pl.BlockSpec((1, Bp, I), lambda t: (t, 0, 0)),   # streamed per-step input
            resident((Bp, H)),                               # initial hidden
            resident((I, HO)),                               # fused weight, input rows
            resident((H, HO)),                               # fused weight, hidden rows
            resident((1, HO)),                               # fused bias
            resident((HO, O)),                               # o2o weight
            resident((1, O)),                                # o2o bias
        ],
        out_specs=pl.BlockSpec((1, Bp, HO), lambda t: (t, 0, 0)),
        out_shape=jax.ShapeDtypeStruct((T, Bp, HO), jnp.float32),
        scratch_shapes=[pltpu.VMEM((Bp, H), jnp.float32)],
        compiler_params=pltpu.CompilerParams(
            dimension_semantics=("arbitrary",)),             # sequential carry over t
    )(inputs, hidden0, w_in, w_hid, b_ho, w_oo, b_oo)

    log_probs = out_comb[:, :B, :O]
    hidden_final = out_comb[-1, :B, O:]
    return log_probs, hidden_final


def rnn_forward(language, inp, hidden, params):
    """Single-step API matching the PyTorch module's forward()."""
    logp, h = rnn_forward_seq(language, inp[None], hidden, params)
    return logp[0], h


def make_params(key, n_lang, input_size, hidden_size, output_size):
    """PyTorch-Linear-style init (uniform +/- 1/sqrt(fan_in)), weights stored
    pre-transposed (in, out) and fused for the kernel."""
    assert n_lang == 0  # all_languages = [] in the original module
    c1 = n_lang + input_size + hidden_size
    c2 = hidden_size + output_size
    ks = jax.random.split(key, 6)

    def lin(kw, kb, fan_in, fan_out):
        bound = 1.0 / jnp.sqrt(jnp.float32(fan_in))
        w = jax.random.uniform(kw, (fan_in, fan_out), jnp.float32, -bound, bound)
        b = jax.random.uniform(kb, (1, fan_out), jnp.float32, -bound, bound)
        return w, b

    w_ih, b_ih = lin(ks[0], ks[1], c1, hidden_size)
    w_io, b_io = lin(ks[2], ks[3], c1, output_size)
    w_oo, b_oo = lin(ks[4], ks[5], c2, output_size)

    # Fuse i2h/i2o column-wise, then split rows into input / hidden parts so the
    # kernel never has to concatenate activations.
    w_cat = jnp.concatenate([w_ih, w_io], axis=1)          # (c1, H+O)
    b_ho = jnp.concatenate([b_ih, b_io], axis=1)           # (1, H+O)
    w_in = w_cat[n_lang:n_lang + input_size, :]            # (I, H+O)
    w_hid = w_cat[n_lang + input_size:, :]                 # (H, H+O)
    return (w_in, w_hid, b_ho, w_oo, b_oo)


def rnn_forward_ref(language, inp, hidden, params):
    """Pure-JAX reference mirroring the PyTorch forward exactly (eval mode)."""
    w_in, w_hid, b_ho, w_oo, b_oo = params
    H = w_hid.shape[0]
    w_cat = jnp.concatenate([w_in, w_hid], axis=0)         # (I+H, H+O)
    w_ih, w_io = w_cat[:, :H], w_cat[:, H:]
    b_ih, b_io = b_ho[:, :H], b_ho[:, H:]
    x = jnp.concatenate([language, inp, hidden], axis=1)
    h_new = x @ w_ih + b_ih
    o1 = x @ w_io + b_io
    o2 = jnp.concatenate([h_new, o1], axis=1) @ w_oo + b_oo
    return jax.nn.log_softmax(o2, axis=1), h_new


if __name__ == "__main__":
    # all_languages = []  ->  n_languages = 0 (module as written)
    n_languages = 0
    input_size = 32      # e.g. n_letters
    hidden_size = 32
    output_size = 32
    batch = 2
    seq_len = 8

    key = jax.random.PRNGKey(0)
    kp, ki, kh = jax.random.split(key, 3)

    params = make_params(kp, n_languages, input_size, hidden_size, output_size)

    language = jnp.zeros((batch, n_languages), jnp.float32)           # (B, 0)
    inputs = jax.random.normal(ki, (seq_len, batch, input_size), jnp.float32)
    hidden0 = jax.random.normal(kh, (batch, hidden_size), jnp.float32)

    # Fused multi-step run: one pallas_call for all T timesteps.
    logp_seq, h_final = rnn_forward_seq(language, inputs, hidden0, params)
    logp_seq = jax.block_until_ready(logp_seq)
    h_final = jax.block_until_ready(h_final)

    # Single-step run (the module's forward signature), T=1 special case.
    logp1, h1 = rnn_forward(language, inputs[0], hidden0, params)
    logp1 = jax.block_until_ready(logp1)
    h1 = jax.block_until_ready(h1)

    # Pure-JAX reference loop.
    h = hidden0
    ref_logps = []
    for t in range(seq_len):
        lp, h = rnn_forward_ref(language, inputs[t], h, params)
        ref_logps.append(lp)
    ref_logps = jnp.stack(ref_logps)

    assert logp_seq.shape == (seq_len, batch, output_size)
    assert h_final.shape == (batch, hidden_size)
    assert jnp.allclose(logp_seq, ref_logps, atol=1e-5, rtol=1e-5)
    assert jnp.allclose(h_final, h, atol=1e-5, rtol=1e-5)

    lp0_ref, h0_ref_out = rnn_forward_ref(language, inputs[0], hidden0, params)
    assert jnp.allclose(logp1, lp0_ref, atol=1e-5, rtol=1e-5)
    assert jnp.allclose(h1, h0_ref_out, atol=1e-5, rtol=1e-5)

    print("KERNEL_OK")
</pallas_src>

<mosaic_0001>
module attributes {stable_mosaic.version = 11 : i64} {
  func.func @rnn_seq_kernel(%arg0: i32, %arg1: memref<1x8x32xf32, #tpu.memory_space<vmem>>, %arg2: memref<8x32xf32, #tpu.memory_space<vmem>>, %arg3: memref<32x64xf32, #tpu.memory_space<vmem>>, %arg4: memref<32x64xf32, #tpu.memory_space<vmem>>, %arg5: memref<1x64xf32, #tpu.memory_space<vmem>>, %arg6: memref<64x32xf32, #tpu.memory_space<vmem>>, %arg7: memref<1x32xf32, #tpu.memory_space<vmem>>, %arg8: memref<1x8x64xf32, #tpu.memory_space<vmem>>, %arg9: memref<8x32xf32, #tpu.memory_space<vmem>>) attributes {dimension_semantics = [#tpu.dimension_semantics<arbitrary>], iteration_bounds = array<i64: 8>, scalar_prefetch = 0 : i64, scratch_operands = 1 : i64, tpu.core_type = #tpu.core_type<tc>, window_params = [{transform_indices = @transform_0, window_bounds = array<i64: 1, 8, 32>}, {pipeline_mode = #tpu.pipeline_mode<synchronous>, transform_indices = @transform_1, window_bounds = array<i64: 8, 32>}, {pipeline_mode = #tpu.pipeline_mode<synchronous>, transform_indices = @transform_2, window_bounds = array<i64: 32, 64>}, {pipeline_mode = #tpu.pipeline_mode<synchronous>, transform_indices = @transform_3, window_bounds = array<i64: 32, 64>}, {pipeline_mode = #tpu.pipeline_mode<synchronous>, transform_indices = @transform_4, window_bounds = array<i64: 1, 64>}, {pipeline_mode = #tpu.pipeline_mode<synchronous>, transform_indices = @transform_5, window_bounds = array<i64: 64, 32>}, {pipeline_mode = #tpu.pipeline_mode<synchronous>, transform_indices = @transform_6, window_bounds = array<i64: 1, 32>}, {transform_indices = @transform_7, window_bounds = array<i64: 1, 8, 64>}]} {
    %c0_i32 = arith.constant 0 : i32
    %0 = arith.cmpi eq, %arg0, %c0_i32 : i32
    %1 = arith.extui %0 : i1 to i32
    %c0_i32_0 = arith.constant 0 : i32
    %2 = arith.cmpi ne, %1, %c0_i32_0 : i32
    scf.if %2 {
      %c0_26 = arith.constant 0 : index
      %c0_27 = arith.constant 0 : index
      %37 = vector.load %arg2[%c0_26, %c0_27] : memref<8x32xf32, #tpu.memory_space<vmem>>, vector<8x32xf32>
      %c0_28 = arith.constant 0 : index
      %c0_29 = arith.constant 0 : index
      %38 = vector.load %arg9[%c0_28, %c0_29] : memref<8x32xf32, #tpu.memory_space<vmem>>, vector<8x32xf32>
      tpu.vector_store %arg9[%c0_28, %c0_29], %37 {strides = array<i32>} : memref<8x32xf32, #tpu.memory_space<vmem>>, vector<8x32xf32>,
    } else {
    }
    %c0 = arith.constant 0 : index
    %c0_1 = arith.constant 0 : index
    %c0_2 = arith.constant 0 : index
    %3 = vector.load %arg1[%c0, %c0_1, %c0_2] : memref<1x8x32xf32, #tpu.memory_space<vmem>>, vector<1x8x32xf32>
    %4 = vector.shape_cast %3 : vector<1x8x32xf32> to vector<8x32xf32>
    %c0_3 = arith.constant 0 : index
    %c0_4 = arith.constant 0 : index
    %5 = vector.load %arg9[%c0_3, %c0_4] : memref<8x32xf32, #tpu.memory_space<vmem>>, vector<8x32xf32>
    %c0_5 = arith.constant 0 : index
    %c0_6 = arith.constant 0 : index
    %6 = vector.load %arg3[%c0_5, %c0_6] : memref<32x64xf32, #tpu.memory_space<vmem>>, vector<32x64xf32>
    %cst = arith.constant dense<0.000000e+00> : vector<8x64xf32>
    %7 = tpu.matmul %4, %6, %cst {dimension_numbers = #tpu.dot_dimension_numbers<[1], [0], [0], [1], [0, 0, 1, 1], [], []>} : vector<8x32xf32>, vector<32x64xf32>, vector<8x64xf32> -> vector<8x64xf32>
    %c0_7 = arith.constant 0 : index
    %c0_8 = arith.constant 0 : index
    %8 = vector.load %arg4[%c0_7, %c0_8] : memref<32x64xf32, #tpu.memory_space<vmem>>, vector<32x64xf32>
    %cst_9 = arith.constant dense<0.000000e+00> : vector<8x64xf32>
    %9 = tpu.matmul %5, %8, %cst_9 {dimension_numbers = #tpu.dot_dimension_numbers<[1], [0], [0], [1], [0, 0, 1, 1], [], []>} : vector<8x32xf32>, vector<32x64xf32>, vector<8x64xf32> -> vector<8x64xf32>
    %10 = arith.addf %7, %9 : vector<8x64xf32>
    %c0_10 = arith.constant 0 : index
    %c0_11 = arith.constant 0 : index
    %11 = vector.load %arg5[%c0_10, %c0_11] : memref<1x64xf32, #tpu.memory_space<vmem>>, vector<1x64xf32>
    %12 = vector.broadcast %11 : vector<1x64xf32> to vector<8x64xf32>
    %13 = arith.addf %10, %12 : vector<8x64xf32>
    %c0_12 = arith.constant 0 : index
    %c0_13 = arith.constant 0 : index
    %14 = vector.load %arg6[%c0_12, %c0_13] : memref<64x32xf32, #tpu.memory_space<vmem>>, vector<64x32xf32>
    %cst_14 = arith.constant dense<0.000000e+00> : vector<8x32xf32>
    %15 = tpu.matmul %13, %14, %cst_14 {dimension_numbers = #tpu.dot_dimension_numbers<[1], [0], [0], [1], [0, 0, 1, 1], [], []>} : vector<8x64xf32>, vector<64x32xf32>, vector<8x32xf32> -> vector<8x32xf32>
    %c0_15 = arith.constant 0 : index
    %c0_16 = arith.constant 0 : index
    %16 = vector.load %arg7[%c0_15, %c0_16] : memref<1x32xf32, #tpu.memory_space<vmem>>, vector<1x32xf32>
    %17 = vector.broadcast %16 : vector<1x32xf32> to vector<8x32xf32>
    %18 = arith.addf %15, %17 : vector<8x32xf32>
    %cst_17 = arith.constant dense<0xFF800000> : vector<8xf32>
    %19 = vector.multi_reduction <maximumf>, %18, %cst_17 [1] : vector<8x32xf32> to vector<8xf32>
    %20 = vector.shape_cast %19 : vector<8xf32> to vector<8x1xf32>
    %21 = vector.broadcast %20 : vector<8x1xf32> to vector<8x32xf32>
    %22 = arith.subf %18, %21 : vector<8x32xf32>
    %23 = math.exp %22 : vector<8x32xf32>
    %cst_18 = arith.constant dense<0.000000e+00> : vector<8xf32>
    %24 = vector.multi_reduction <add>, %23, %cst_18 [1] : vector<8x32xf32> to vector<8xf32>
    %25 = vector.shape_cast %24 : vector<8xf32> to vector<8x1xf32>
    %26 = math.log %25 : vector<8x1xf32>
    %27 = vector.extract_strided_slice %13 {offsets = [0, 0], sizes = [8, 32], strides = [1, 1]} : vector<8x64xf32> to vector<8x32xf32>
    %c0_19 = arith.constant 0 : index
    %c0_20 = arith.constant 0 : index
    %28 = vector.load %arg9[%c0_19, %c0_20] : memref<8x32xf32, #tpu.memory_space<vmem>>, vector<8x32xf32>
    tpu.vector_store %arg9[%c0_19, %c0_20], %27 {strides = array<i32>} : memref<8x32xf32, #tpu.memory_space<vmem>>, vector<8x32xf32>,
    %29 = vector.broadcast %26 : vector<8x1xf32> to vector<8x32xf32>
    %30 = arith.subf %22, %29 : vector<8x32xf32>
    %c0_21 = arith.constant 0 : index
    %c0_22 = arith.constant 0 : index
    %c0_23 = arith.constant 0 : index
    %31 = vector.load %arg8[%c0_21, %c0_22, %c0_23] : memref<1x8x64xf32, #tpu.memory_space<vmem>>, vector<1x8x32xf32>
    %32 = vector.shape_cast %31 : vector<1x8x32xf32> to vector<8x32xf32>
    %33 = vector.shape_cast %30 : vector<8x32xf32> to vector<1x8x32xf32>
    tpu.vector_store %arg8[%c0_21, %c0_22, %c0_23], %33 {strides = array<i32>} : memref<1x8x64xf32, #tpu.memory_space<vmem>>, vector<1x8x32xf32>,
    %c0_24 = arith.constant 0 : index
    %c0_25 = arith.constant 0 : index
    %c32 = arith.constant 32 : index
    %34 = vector.load %arg8[%c0_24, %c0_25, %c32] : memref<1x8x64xf32, #tpu.memory_space<vmem>>, vector<1x8x32xf32>
    %35 = vector.shape_cast %34 : vector<1x8x32xf32> to vector<8x32xf32>
    %36 = vector.shape_cast %27 : vector<8x32xf32> to vector<1x8x32xf32>
    tpu.vector_store %arg8[%c0_24, %c0_25, %c32], %36 {strides = array<i32>} : memref<1x8x64xf32, #tpu.memory_space<vmem>>, vector<1x8x32xf32>,
    return
  }
  func.func @transform_0(%arg0: i32) -> (i32, i32, i32) {
    %c0_i32 = arith.constant 0 : i32
    %c0_i32_0 = arith.constant 0 : i32
    %c0_i32_1 = arith.constant 0 : i32
    return %arg0, %c0_i32, %c0_i32_0 : i32, i32, i32
  }
  func.func @transform_1(%arg0: i32) -> (i32, i32) {
    %c0_i32 = arith.constant 0 : i32
    %c0_i32_0 = arith.constant 0 : i32
    %c0_i32_1 = arith.constant 0 : i32
    return %c0_i32, %c0_i32_0 : i32, i32
  }
  func.func @transform_2(%arg0: i32) -> (i32, i32) {
    %c0_i32 = arith.constant 0 : i32
    %c0_i32_0 = arith.constant 0 : i32
    %c0_i32_1 = arith.constant 0 : i32
    return %c0_i32, %c0_i32_0 : i32, i32
  }
  func.func @transform_3(%arg0: i32) -> (i32, i32) {
    %c0_i32 = arith.constant 0 : i32
    %c0_i32_0 = arith.constant 0 : i32
    %c0_i32_1 = arith.constant 0 : i32
    return %c0_i32, %c0_i32_0 : i32, i32
  }
  func.func @transform_4(%arg0: i32) -> (i32, i32) {
    %c0_i32 = arith.constant 0 : i32
    %c0_i32_0 = arith.constant 0 : i32
    %c0_i32_1 = arith.constant 0 : i32
    return %c0_i32, %c0_i32_0 : i32, i32
  }
  func.func @transform_5(%arg0: i32) -> (i32, i32) {
    %c0_i32 = arith.constant 0 : i32
    %c0_i32_0 = arith.constant 0 : i32
    %c0_i32_1 = arith.constant 0 : i32
    return %c0_i32, %c0_i32_0 : i32, i32
  }
  func.func @transform_6(%arg0: i32) -> (i32, i32) {
    %c0_i32 = arith.constant 0 : i32
    %c0_i32_0 = arith.constant 0 : i32
    %c0_i32_1 = arith.constant 0 : i32
    return %c0_i32, %c0_i32_0 : i32, i32
  }
  func.func @transform_7(%arg0: i32) -> (i32, i32, i32) {
    %c0_i32 = arith.constant 0 : i32
    %c0_i32_0 = arith.constant 0 : i32
    %c0_i32_1 = arith.constant 0 : i32
    return %arg0, %c0_i32, %c0_i32_0 : i32, i32, i32
  }
}

</mosaic_0001>

<llo_original>
// kernel: tpu_custom_call.1
$region0: #{tpu_custom_call.1}
  #allocation0 [shape = 'u32[]', space=smem, size = 0x4, offset = 0x4, fixed_abs, tag = 'smem constant byte address 0x4 - core index']
  #allocation1 [shape = 'u32[144,128]{1,0:T(1,128)}', space=vmem, size = 0x12000, scoped, tag = 'internal scratch']
  #allocation2 [shape = 'f32[8,32]{1,0:T(8,128)}', space=vmem, size = 0x1000, scoped, tag = 'scratch operand']
  %s0 = inlined_call_operand.vmem [shape: f32[8,8,32], index: 0, kind: input, shape index: {}]
  %s1 = inlined_call_operand.hbm [shape: f32[8,32], index: 1, kind: input, shape index: {}]
  %s2 = inlined_call_operand.vmem [shape: f32[32,64], index: 2, kind: input, shape index: {}]
  %s3 = inlined_call_operand.hbm [shape: f32[32,64], index: 3, kind: input, shape index: {}]
  %s4 = inlined_call_operand.vmem [shape: f32[1,64], index: 4, kind: input, shape index: {}]
  %s5 = inlined_call_operand.vmem [shape: f32[64,32], index: 5, kind: input, shape index: {}]
  %s6 = inlined_call_operand.vmem [shape: f32[1,32], index: 6, kind: input, shape index: {}]
  %s7 = inlined_call_operand.hbm [shape: f32[8,8,64], index: 7, kind: output, shape index: {}]
  %s8 = sld [smem:[#allocation0]]
  $region73: #{tpu_custom_call.1} parent=0
    _
  %s10 = ssub.s32 1, %s8
  %s11 = scalar_select 0, %s10, %s8
  $region1: #{tpu_custom_call.1} parent=0
    #allocation3 [shape = 'u8[4096]{0}', space=vmem, size = 0x1000, scoped, tag = 'input window, operand 1, single buffered']
    #allocation4 [shape = 's32[2]{0}', space=sflag, size = 0x8, scoped, tag = 'scoped memory for tpu_custom_call.1']
    #allocation5 [shape = 's32[2]{0}', space=sflag, size = 0x8, scoped, tag = 'scoped memory for tpu_custom_call.1']
    #allocation6 [shape = 'u8[16384]{0}', space=vmem, size = 0x4000, scoped, tag = 'input window, operand 3, single buffered']
    #allocation7 [shape = 's32[1]{0}', space=sflag, size = 0x4, scoped, tag = 'scoped memory for tpu_custom_call.1']
    #allocation8 [shape = 'u8[8192]{0}', space=vmem, size = 0x2000, scoped, tag = 'output window, operand 0']
    %12 = vsyncpa [#allocation4], 0
    %13 = vsyncpa [#allocation7], 0
    %14 = vsyncpa [#allocation5], 0
    %s15 = scalar_lea.sflag [#allocation5], 1
    %16 = vsyncpa %s15, 0
    loop: start=0, step=1, limit=10
    $region2: #{tpu_custom_call.1} parent=1 // loop_pre_header
      _
    $region3: #{tpu_custom_call.1} parent=1 // loop_header
      %s18 = sphi 0, %s22
      %p19 = scmp.ge.s32.totalorder %s18, 10
      %s28 = sphi 0, %s30
      %s31 = sphi 0, %s28
      %s32 = sphi 0, %s31
      %s48 = sphi 0, %s32
      %s52 = sphi 0, %s52
      %s54 = sphi 0, %s52
      %s55 = sphi 0, %s54
      %s69 = sphi 0, %s55
      %s73 = sphi 0, %s73
      %s75 = sphi 0, %s73
      %s76 = sphi 0, %s75
      %s90 = sphi 0, %s76
      %s94 = sphi 0, %s94
      %s96 = sphi 0, %s94
      %s97 = sphi 0, %s96
      %s111 = sphi 0, %s97
      %s115 = sphi 0, %s115
      %s117 = sphi 0, %s115
      %s118 = sphi 0, %s117
      %s132 = sphi 0, %s118
      %s136 = sphi 0, %s136
      %s138 = sphi 0, %s136
      %s139 = sphi 0, %s138
      %s153 = sphi 0, %s139
      %s157 = sphi 0, %s157
      %s159 = sphi 0, %s157
      %s160 = sphi 0, %s159
      %s174 = sphi 0, %s160
      %s180 = sphi 0, %s182
      %s183 = sphi 0, %s180
      %s184 = sphi 0, %s183
      %s200 = sphi 0, %s184
    $region4: #{tpu_custom_call.1} parent=1 // loop_header_branch
      %21 = sbr.rel (%p19) target = $region8
    $region5: #{tpu_custom_call.1} parent=1 // loop_body
      %s23 = ssub.s32 %s18, 1
      %s24 = ssub.s32 %s18, 2
      %s25 = sadd.s32 %s18, 1
      %s26 = ssub.s32 %s18, %s25
      %p27 = scmp.eq.s32.totalorder %s26, 0
      %s29 = sadd.s32 %s28, 1
      %s30 = scalar_select %p27, %s28, %s29
      %p33 = pneg %p27
      %p34 = scmp.eq.s32.totalorder %s18, 7
      %p35 = por %p33, %p34
      %p36 = scmp.ne.s32.totalorder %s28, %s31
      %p37 = scmp.eq.s32.totalorder %s18, 0
      %p38 = por %p36, %p37
      %p39 = scmp.ne.s32.totalorder %s28, %s31
      %p40 = scmp.eq.s32.totalorder %s23, 7
      %p41 = por %p39, %p40
      %p42 = scmp.ne.s32.totalorder %s31, %s32
      %p43 = scmp.eq.s32.totalorder %s23, 0
      %p44 = por %p42, %p43
      %p45 = scmp.ne.s32.totalorder %s31, %s32
      %p46 = scmp.eq.s32.totalorder %s24, 7
      %p47 = por %p45, %p46
      %p49 = scmp.ne.s32.totalorder %s32, %s48
      %p50 = scmp.eq.s32.totalorder %s24, 0
      %p51 = por %p49, %p50
      %s53 = sadd.s32 %s52, 1
      %p56 = scmp.eq.s32.totalorder %s18, 7
      %p57 = scmp.ne.s32.totalorder %s52, %s54
      %p58 = scmp.eq.s32.totalorder %s18, 0
      %p59 = por %p57, %p58
      %p60 = scmp.ne.s32.totalorder %s52, %s54
      %p61 = scmp.eq.s32.totalorder %s23, 7
      %p62 = por %p60, %p61
      %p63 = scmp.ne.s32.totalorder %s54, %s55
      %p64 = scmp.eq.s32.totalorder %s23, 0
      %p65 = por %p63, %p64
      %p66 = scmp.ne.s32.totalorder %s54, %s55
      %p67 = scmp.eq.s32.totalorder %s24, 7
      %p68 = por %p66, %p67
      %p70 = scmp.ne.s32.totalorder %s55, %s69
      %p71 = scmp.eq.s32.totalorder %s24, 0
      %p72 = por %p70, %p71
      %s74 = sadd.s32 %s73, 1
      %p77 = scmp.eq.s32.totalorder %s18, 7
      %p78 = scmp.ne.s32.totalorder %s73, %s75
      %p79 = scmp.eq.s32.totalorder %s18, 0
      %p80 = por %p78, %p79
      %p81 = scmp.ne.s32.totalorder %s73, %s75
      %p82 = scmp.eq.s32.totalorder %s23, 7
      %p83 = por %p81, %p82
      %p84 = scmp.ne.s32.totalorder %s75, %s76
      %p85 = scmp.eq.s32.totalorder %s23, 0
      %p86 = por %p84, %p85
      %p87 = scmp.ne.s32.totalorder %s75, %s76
      %p88 = scmp.eq.s32.totalorder %s24, 7
      %p89 = por %p87, %p88
      %p91 = scmp.ne.s32.totalorder %s76, %s90
      %p92 = scmp.eq.s32.totalorder %s24, 0
      %p93 = por %p91, %p92
      %s95 = sadd.s32 %s94, 1
      %p98 = scmp.eq.s32.totalorder %s18, 7
      %p99 = scmp.ne.s32.totalorder %s94, %s96
      %p100 = scmp.eq.s32.totalorder %s18, 0
      %p101 = por %p99, %p100
      %p102 = scmp.ne.s32.totalorder %s94, %s96
      %p103 = scmp.eq.s32.totalorder %s23, 7
      %p104 = por %p102, %p103
      %p105 = scmp.ne.s32.totalorder %s96, %s97
      %p106 = scmp.eq.s32.totalorder %s23, 0
      %p107 = por %p105, %p106
      %p108 = scmp.ne.s32.totalorder %s96, %s97
      %p109 = scmp.eq.s32.totalorder %s24, 7
      %p110 = por %p108, %p109
      %p112 = scmp.ne.s32.totalorder %s97, %s111
      %p113 = scmp.eq.s32.totalorder %s24, 0
      %p114 = por %p112, %p113
      %s116 = sadd.s32 %s115, 1
      %p119 = scmp.eq.s32.totalorder %s18, 7
      %p120 = scmp.ne.s32.totalorder %s115, %s117
      %p121 = scmp.eq.s32.totalorder %s18, 0
      %p122 = por %p120, %p121
      %p123 = scmp.ne.s32.totalorder %s115, %s117
      %p124 = scmp.eq.s32.totalorder %s23, 7
      %p125 = por %p123, %p124
      %p126 = scmp.ne.s32.totalorder %s117, %s118
      %p127 = scmp.eq.s32.totalorder %s23, 0
      %p128 = por %p126, %p127
      %p129 = scmp.ne.s32.totalorder %s117, %s118
      %p130 = scmp.eq.s32.totalorder %s24, 7
      %p131 = por %p129, %p130
      %p133 = scmp.ne.s32.totalorder %s118, %s132
      %p134 = scmp.eq.s32.totalorder %s24, 0
      %p135 = por %p133, %p134
      %s137 = sadd.s32 %s136, 1
      %p140 = scmp.eq.s32.totalorder %s18, 7
      %p141 = scmp.ne.s32.totalorder %s136, %s138
      %p142 = scmp.eq.s32.totalorder %s18, 0
      %p143 = por %p141, %p142
      %p144 = scmp.ne.s32.totalorder %s136, %s138
      %p145 = scmp.eq.s32.totalorder %s23, 7
      %p146 = por %p144, %p145
      %p147 = scmp.ne.s32.totalorder %s138, %s139
      %p148 = scmp.eq.s32.totalorder %s23, 0
      %p149 = por %p147, %p148
      %p150 = scmp.ne.s32.totalorder %s138, %s139
      %p151 = scmp.eq.s32.totalorder %s24, 7
      %p152 = por %p150, %p151
      %p154 = scmp.ne.s32.totalorder %s139, %s153
      %p155 = scmp.eq.s32.totalorder %s24, 0
      %p156 = por %p154, %p155
      %s158 = sadd.s32 %s157, 1
      %p161 = scmp.eq.s32.totalorder %s18, 7
      %p162 = scmp.ne.s32.totalorder %s157, %s159
      %p163 = scmp.eq.s32.totalorder %s18, 0
      %p164 = por %p162, %p163
      %p165 = scmp.ne.s32.totalorder %s157, %s159
      %p166 = scmp.eq.s32.totalorder %s23, 7
      %p167 = por %p165, %p166
      %p168 = scmp.ne.s32.totalorder %s159, %s160
      %p169 = scmp.eq.s32.totalorder %s23, 0
      %p170 = por %p168, %p169
      %p171 = scmp.ne.s32.totalorder %s159, %s160
      %p172 = scmp.eq.s32.totalorder %s24, 7
      %p173 = por %p171, %p172
      %p175 = scmp.ne.s32.totalorder %s160, %s174
      %p176 = scmp.eq.s32.totalorder %s24, 0
      %p177 = por %p175, %p176
      %s178 = ssub.s32 %s18, %s25
      %p179 = scmp.eq.s32.totalorder %s178, 0
      %s181 = sadd.s32 %s180, 1
      %s182 = scalar_select %p179, %s180, %s181
      %p185 = pneg %p179
      %p186 = scmp.eq.s32.totalorder %s18, 7
      %p187 = por %p185, %p186
      %p188 = scmp.ne.s32.totalorder %s180, %s183
      %p189 = scmp.eq.s32.totalorder %s18, 0
      %p190 = por %p188, %p189
      %p191 = scmp.ne.s32.totalorder %s180, %s183
      %p192 = scmp.eq.s32.totalorder %s23, 7
      %p193 = por %p191, %p192
      %p194 = scmp.ne.s32.totalorder %s183, %s184
      %p195 = scmp.eq.s32.totalorder %s23, 0
      %p196 = por %p194, %p195
      %p197 = scmp.ne.s32.totalorder %s183, %s184
      %p198 = scmp.eq.s32.totalorder %s24, 7
      %p199 = por %p197, %p198
      %p201 = scmp.ne.s32.totalorder %s184, %s200
      %p202 = scmp.eq.s32.totalorder %s24, 0
      %p203 = por %p201, %p202
      %p204 = scmp.le.s32.totalorder 1, %s18
      %p205 = scmp.lt.s32.totalorder %s18, 9
      %p206 = pnand %p204, %p205
      %p207 = pneg %p206
      // Predicated region
      $region9: #{tpu_custom_call.1} parent=5 // pred_check
        _
      $region10: #{tpu_custom_call.1} parent=5 // pred_check_branch
        %209 = sbr.rel (%p206) target = $region12
      $region11: #{tpu_custom_call.1} parent=5 // pred_region
        %s210 = ssub.s32 %s18, 1
        // Predicated region
        $region13: #{tpu_custom_call.1} parent=11 // pred_check
          %p211 = pneg %p65
        $region14: #{tpu_custom_call.1} parent=11 // pred_check_branch
          %213 = sbr.rel (%p211) target = $region16
        $region15: #{tpu_custom_call.1} parent=11 // pred_region
          %s215 = ssub.s32 128, 128
          %216 = vsyncadd [#allocation4], %s215
          %s218 = sshll.u32 [#allocation3], 4
          %s219 = int_to_ptr.vmem [resolvable:$true] %s218
          %221 = dma.hbm_to_vmem [thread:$0]  %s1, 128, %s219, [#allocation4]
        $region16: #{tpu_custom_call.1} parent=11 // pred_fallthru
          _
        // Predicated region
        $region17: #{tpu_custom_call.1} parent=11 // pred_check
          %p222 = pneg %p86
        $region18: #{tpu_custom_call.1} parent=11 // pred_check_branch
          %224 = sbr.rel (%p222) target = $region20
        $region19: #{tpu_custom_call.1} parent=11 // pred_region
          _
        $region20: #{tpu_custom_call.1} parent=11 // pred_fallthru
          _
        // Predicated region
        $region21: #{tpu_custom_call.1} parent=11 // pred_check
          %p225 = pneg %p107
        $region22: #{tpu_custom_call.1} parent=11 // pred_check_branch
          %227 = sbr.rel (%p225) target = $region24
        $region23: #{tpu_custom_call.1} parent=11 // pred_region
          %s229 = ssub.s32 512, 512
          %230 = vsyncadd [#allocation7], %s229
          %s231 = sshll.u32 [#allocation6], 4
          %s232 = int_to_ptr.vmem [resolvable:$true] %s231
          %237 = dma.hbm_to_vmem [thread:$0]  %s3, 512, %s232, [#allocation7], 128, 128, 8
        $region24: #{tpu_custom_call.1} parent=11 // pred_fallthru
          _
        // Predicated region
        $region25: #{tpu_custom_call.1} parent=11 // pred_check
          %p238 = pneg %p128
        $region26: #{tpu_custom_call.1} parent=11 // pred_check_branch
          %240 = sbr.rel (%p238) target = $region28
        $region27: #{tpu_custom_call.1} parent=11 // pred_region
          _
        $region28: #{tpu_custom_call.1} parent=11 // pred_fallthru
          _
        // Predicated region
        $region29: #{tpu_custom_call.1} parent=11 // pred_check
          %p241 = pneg %p149
        $region30: #{tpu_custom_call.1} parent=11 // pred_check_branch
          %243 = sbr.rel (%p241) target = $region32
        $region31: #{tpu_custom_call.1} parent=11 // pred_region
          _
        $region32: #{tpu_custom_call.1} parent=11 // pred_fallthru
          _
        // Predicated region
        $region33: #{tpu_custom_call.1} parent=11 // pred_check
          %p244 = pneg %p170
        $region34: #{tpu_custom_call.1} parent=11 // pred_check_branch
          %246 = sbr.rel (%p244) target = $region36
        $region35: #{tpu_custom_call.1} parent=11 // pred_region
          _
        $region36: #{tpu_custom_call.1} parent=11 // pred_fallthru
          _
      $region12: #{tpu_custom_call.1} parent=5 // pred_fallthru
        _
      %p247 = scmp.lt.s32.totalorder %s18, 8
      // Predicated region
      $region37: #{tpu_custom_call.1} parent=5 // pred_check
        %p248 = pneg %p247
      $region38: #{tpu_custom_call.1} parent=5 // pred_check_branch
        %250 = sbr.rel (%p248) target = $region40
      $region39: #{tpu_custom_call.1} parent=5 // pred_region
        // Predicated region
        $region41: #{tpu_custom_call.1} parent=39 // pred_check
          %p251 = pneg %p38
        $region42: #{tpu_custom_call.1} parent=39 // pred_check_branch
          %253 = sbr.rel (%p251) target = $region44
        $region43: #{tpu_custom_call.1} parent=39 // pred_region
          %p254 = scmp.lt.s32.totalorder %s18, 7
          %s255 = scalar_select %p254, %s18, 7
          %s256 = smul.addr %s255, 8
          %s257 = scalar_lea.vmem %s0, %s256
        $region44: #{tpu_custom_call.1} parent=39 // pred_fallthru
          _
      $region40: #{tpu_custom_call.1} parent=5 // pred_fallthru
        _
      %p258 = scmp.le.s32.totalorder 1, %s18
      %p259 = scmp.lt.s32.totalorder %s18, 9
      %p260 = pnand %p258, %p259
      %p261 = pneg %p260
      // Predicated region
      $region45: #{tpu_custom_call.1} parent=5 // pred_check
        _
      $region46: #{tpu_custom_call.1} parent=5 // pred_check_branch
        %263 = sbr.rel (%p260) target = $region48
      $region47: #{tpu_custom_call.1} parent=5 // pred_region
        %s264 = ssub.s32 %s18, 1
        // Predicated region
        $region49: #{tpu_custom_call.1} parent=47 // pred_check
          %p265 = pneg %p65
        $region50: #{tpu_custom_call.1} parent=47 // pred_check_branch
          %267 = sbr.rel (%p265) target = $region52
        $region51: #{tpu_custom_call.1} parent=47 // pred_region
          %268 = dma.done [#allocation4], 128
        $region52: #{tpu_custom_call.1} parent=47 // pred_fallthru
          _
        // Predicated region
        $region53: #{tpu_custom_call.1} parent=47 // pred_check
          %p269 = pneg %p107
        $region54: #{tpu_custom_call.1} parent=47 // pred_check_branch
          %271 = sbr.rel (%p269) target = $region56
        $region55: #{tpu_custom_call.1} parent=47 // pred_region
          %272 = dma.done [#allocation7], 512
        $region56: #{tpu_custom_call.1} parent=47 // pred_fallthru
          _
        %p273 = scmp.lt.s32.totalorder %s23, 7
        %s274 = scalar_select %p273, %s23, 7
        %s275 = smul.addr %s274, 8
        %s276 = scalar_lea.vmem %s0, %s275
        %p277 = pneg %p44
        %p278 = pneg %p41
        %p279 = pneg %p65
        %p280 = pneg %p62
        %p281 = pneg %p86
        %p282 = pneg %p83
        %p283 = pneg %p107
        %p284 = pneg %p104
        %p285 = pneg %p128
        %p286 = pneg %p125
        %p287 = pneg %p149
        %p288 = pneg %p146
        %p289 = pneg %p170
        %p290 = pneg %p167
        %p291 = pneg %p196
        %p292 = pneg %p193
        %s293 = sand.u32 %s183, 1
        %s294 = scalar_lea.sflag [#allocation5], %s293
        %s295 = sand.u32 %s183, 1
        %s296 = smul.addr %s295, 8
        %s297 = scalar_lea.vmem [#allocation8], %s296
        %p298 = scmp.lt.s32.totalorder %s23, 7
        %s299 = scalar_select %p298, %s23, 7
        %s300 = smul.addr %s299, 8
        %s301 = scalar_lea.vmem %s0, %s300
        %p302 = scmp.eq.s32.totalorder %s23, 0
        // Predicated region
        $region57: #{tpu_custom_call.1} parent=47 // pred_check
          %p303 = pneg %p302
        $region58: #{tpu_custom_call.1} parent=47 // pred_check_branch
          %305 = sbr.rel (%p303) target = $region60
        $region59: #{tpu_custom_call.1} parent=47 // pred_region
          %v306 = vld [vmem:[#allocation3] sm:$0xff]
          %vm307 = vcmask 261120
          %308 = vst.msk [vmem:[#allocation2] sm:$0xff] %vm307, %v306
        $region60: #{tpu_custom_call.1} parent=47 // pred_fallthru
          _
        %v309 = vld [vmem:[%s301] sm:$0xff]
        %v310 = vld [vmem:[#allocation2] sm:$0xff]
        %v311 = vld [vmem:[%s2] sm:$0xff]
        %v312 = vld [vmem:[%s2 + $0x8] sm:$0xff]
        %v313 = vld [vmem:[%s2 + $0x10] sm:$0xff]
        %v314 = vld [vmem:[%s2 + $0x18] sm:$0xff]
        %v315 = vld [vmem:[#allocation6] sm:$0xff]
        %v316 = vld [vmem:[#allocation6 + $0x8] sm:$0xff]
        %v317 = vld [vmem:[#allocation6 + $0x10] sm:$0xff]
        %v318 = vld [vmem:[#allocation6 + $0x18] sm:$0xff]
        %vm319 = vcmask 261120
        %v321 = vsel %vm319, %v310, 0
        %323 = vmatprep.subr.mxu0 0.0
        %324 = vmatpush1.msra.mxu0 0.0
        %325 = vmatprep.subr.mxu0 0.0
        %326 = vmatpush1.msra.mxu0 0.0
        %327 = vmatprep.subr.mxu0 0.0
        %328 = vmatpush1.msra.mxu0 0.0
        %329 = vmatprep.subr.mxu0 0.0
        %330 = vmatpush1.msra.mxu0 0.0
        %331 = vmatprep.subr.mxu0 0.0
        %332 = vmatpush1.msra.mxu0 0.0
        %333 = vmatprep.subr.mxu0 0.0
        %334 = vmatpush1.msra.mxu0 0.0
        %335 = vmatprep.subr.mxu0 0.0
        %336 = vmatpush1.msra.mxu0 0.0
        %337 = vmatprep.subr.mxu0 0.0
        %338 = vmatpush1.msra.mxu0 0.0
        %339 = vmatprep.subr.mxu0 0.0
        %340 = vmatpush1.msra.mxu0 0.0
        %341 = vmatprep.subr.mxu0 0.0
        %342 = vmatpush1.msra.mxu0 0.0
        %343 = vmatprep.subr.mxu0 0.0
        %344 = vmatpush1.msra.mxu0 0.0
        %345 = vmatprep.subr.mxu0 0.0
        %346 = vmatpush1.msra.mxu0 0.0
        %347 = vmatprep.subr.mxu0 0.0
        %348 = vmatpush1.msra.mxu0 %v318
        %349 = vmatprep.subr.mxu0 0.0
        %350 = vmatpush1.msra.mxu0 %v317
        %351 = vmatprep.subr.mxu0 0.0
        %352 = vmatpush1.msra.mxu0 %v316
        %353 = vmatprep.subr.mxu0 0.0
        %354 = vmatpush1.msra.mxu0 %v315
        %355 = vmatprep.subr.mxu0 0.0
        %356 = vmatpush2.msra.mxu0 0.0
        %357 = vmatprep.subr.mxu0 0.0
        %358 = vmatpush2.msra.mxu0 0.0
        %359 = vmatprep.subr.mxu0 0.0
        %360 = vmatpush2.msra.mxu0 0.0
        %361 = vmatprep.subr.mxu0 0.0
        %362 = vmatpush2.msra.mxu0 0.0
        %363 = vmatprep.subr.mxu0 0.0
        %364 = vmatpush2.msra.mxu0 0.0
        %365 = vmatprep.subr.mxu0 0.0
        %366 = vmatpush2.msra.mxu0 0.0
        %367 = vmatprep.subr.mxu0 0.0
        %368 = vmatpush2.msra.mxu0 0.0
        %369 = vmatprep.subr.mxu0 0.0
        %370 = vmatpush2.msra.mxu0 0.0
        %371 = vmatprep.subr.mxu0 0.0
        %372 = vmatpush2.msra.mxu0 0.0
        %373 = vmatprep.subr.mxu0 0.0
        %374 = vmatpush2.msra.mxu0 0.0
        %375 = vmatprep.subr.mxu0 0.0
        %376 = vmatpush2.msra.mxu0 0.0
        %377 = vmatprep.subr.mxu0 0.0
        %378 = vmatpush2.msra.mxu0 0.0
        %379 = vmatprep.subr.mxu0 0.0
        %380 = vmatpush2.msra.mxu0 0.0
        %381 = vmatprep.subr.mxu0 0.0
        %382 = vmatpush2.msra.mxu0 0.0
        %383 = vmatprep.subr.mxu0 0.0
        %384 = vmatpush2.msra.mxu0 0.0
        %385 = vmatprep.subr.mxu0 0.0
        %386 = vmatpush2.msra.mxu0 0.0
        %387 = vmatprep.mubr.f32.mxu0 0.0
        %388 = vmatmul.mubr.f32.gmra.mxu0 %v321
        %v389 = vpop.f32.mrf.mxu0
        %v390 = vadd.f32 0.0, %v389
        %v391 = vpop.f32.mrf.mxu0
        %392 = vdwg.mxu0
        %v394 = vsel %vm319, %v309, 0
        %396 = vmatprep.subr.mxu0 0.0
        %397 = vmatpush1.msra.mxu0 0.0
        %398 = vmatprep.subr.mxu0 0.0
        %399 = vmatpush1.msra.mxu0 0.0
        %400 = vmatprep.subr.mxu0 0.0
        %401 = vmatpush1.msra.mxu0 0.0
        %402 = vmatprep.subr.mxu0 0.0
        %403 = vmatpush1.msra.mxu0 0.0
        %404 = vmatprep.subr.mxu0 0.0
        %405 = vmatpush1.msra.mxu0 0.0
        %406 = vmatprep.subr.mxu0 0.0
        %407 = vmatpush1.msra.mxu0 0.0
        %408 = vmatprep.subr.mxu0 0.0
        %409 = vmatpush1.msra.mxu0 0.0
        %410 = vmatprep.subr.mxu0 0.0
        %411 = vmatpush1.msra.mxu0 0.0
        %412 = vmatprep.subr.mxu0 0.0
        %413 = vmatpush1.msra.mxu0 0.0
        %414 = vmatprep.subr.mxu0 0.0
        %415 = vmatpush1.msra.mxu0 0.0
        %416 = vmatprep.subr.mxu0 0.0
        %417 = vmatpush1.msra.mxu0 0.0
        %418 = vmatprep.subr.mxu0 0.0
        %419 = vmatpush1.msra.mxu0 0.0
        %420 = vmatprep.subr.mxu0 0.0
        %421 = vmatpush1.msra.mxu0 %v314
        %422 = vmatprep.subr.mxu0 0.0
        %423 = vmatpush1.msra.mxu0 %v313
        %424 = vmatprep.subr.mxu0 0.0
        %425 = vmatpush1.msra.mxu0 %v312
        %426 = vmatprep.subr.mxu0 0.0
        %427 = vmatpush1.msra.mxu0 %v311
        %428 = vmatprep.subr.mxu0 0.0
        %429 = vmatpush2.msra.mxu0 0.0
        %430 = vmatprep.subr.mxu0 0.0
        %431 = vmatpush2.msra.mxu0 0.0
        %432 = vmatprep.subr.mxu0 0.0
        %433 = vmatpush2.msra.mxu0 0.0
        %434 = vmatprep.subr.mxu0 0.0
        %435 = vmatpush2.msra.mxu0 0.0
        %436 = vmatprep.subr.mxu0 0.0
        %437 = vmatpush2.msra.mxu0 0.0
        %438 = vmatprep.subr.mxu0 0.0
        %439 = vmatpush2.msra.mxu0 0.0
        %440 = vmatprep.subr.mxu0 0.0
        %441 = vmatpush2.msra.mxu0 0.0
        %442 = vmatprep.subr.mxu0 0.0
        %443 = vmatpush2.msra.mxu0 0.0
        %444 = vmatprep.subr.mxu0 0.0
        %445 = vmatpush2.msra.mxu0 0.0
        %446 = vmatprep.subr.mxu0 0.0
        %447 = vmatpush2.msra.mxu0 0.0
        %448 = vmatprep.subr.mxu0 0.0
        %449 = vmatpush2.msra.mxu0 0.0
        %450 = vmatprep.subr.mxu0 0.0
        %451 = vmatpush2.msra.mxu0 0.0
        %452 = vmatprep.subr.mxu0 0.0
        %453 = vmatpush2.msra.mxu0 0.0
        %454 = vmatprep.subr.mxu0 0.0
        %455 = vmatpush2.msra.mxu0 0.0
        %456 = vmatprep.subr.mxu0 0.0
        %457 = vmatpush2.msra.mxu0 0.0
        %458 = vmatprep.subr.mxu0 0.0
        %459 = vmatpush2.msra.mxu0 0.0
        %460 = vmatprep.mubr.f32.mxu0 0.0
        %461 = vmatmul.mubr.f32.gmra.mxu0 %v394
        %v462 = vpop.f32.mrf.mxu0
        %v463 = vadd.f32 %v390, %v462
        %v464 = vpop.f32.mrf.mxu0
        %465 = vdwg.mxu0
        %v466 = vld [vmem:[%s4] sm:$0x1]
        %v468 = vlaneseq
        %v469 = vshrl.u32 %v468, 7
        %v470 = vsub.s32 0, %v469
        %v471 = vrot.slane %v466, %v470
        %v473 = vadd.f32 %v463, %v471
        %v474 = vld [vmem:[%s5] sm:$0xff]
        %v475 = vld [vmem:[%s5 + $0x8] sm:$0xff]
        %v476 = vld [vmem:[%s5 + $0x10] sm:$0xff]
        %v477 = vld [vmem:[%s5 + $0x18] sm:$0xff]
        %v478 = vld [vmem:[%s5 + $0x20] sm:$0xff]
        %v479 = vld [vmem:[%s5 + $0x28] sm:$0xff]
        %v480 = vld [vmem:[%s5 + $0x30] sm:$0xff]
        %v481 = vld [vmem:[%s5 + $0x38] sm:$0xff]
        %v482 = vld [vmem:[%s6] sm:$0x1]
        %v484 = vlaneseq
        %v485 = vshrl.u32 %v484, 7
        %v486 = vsub.s32 0, %v485
        %v487 = vrot.slane %v482, %v486
        %vm489 = vcmask 523264
        %v491 = vsel %vm489, %v473, 0
        %493 = vmatprep.subr.mxu0 0.0
        %494 = vmatpush1.msra.mxu0 0.0
        %495 = vmatprep.subr.mxu0 0.0
        %496 = vmatpush1.msra.mxu0 0.0
        %497 = vmatprep.subr.mxu0 0.0
        %498 = vmatpush1.msra.mxu0 0.0
        %499 = vmatprep.subr.mxu0 0.0
        %500 = vmatpush1.msra.mxu0 0.0
        %501 = vmatprep.subr.mxu0 0.0
        %502 = vmatpush1.msra.mxu0 0.0
        %503 = vmatprep.subr.mxu0 0.0
        %504 = vmatpush1.msra.mxu0 0.0
        %505 = vmatprep.subr.mxu0 0.0
        %506 = vmatpush1.msra.mxu0 0.0
        %507 = vmatprep.subr.mxu0 0.0
        %508 = vmatpush1.msra.mxu0 0.0
        %509 = vmatprep.subr.mxu0 0.0
        %510 = vmatpush1.msra.mxu0 %v481
        %511 = vmatprep.subr.mxu0 0.0
        %512 = vmatpush1.msra.mxu0 %v480
        %513 = vmatprep.subr.mxu0 0.0
        %514 = vmatpush1.msra.mxu0 %v479
        %515 = vmatprep.subr.mxu0 0.0
        %516 = vmatpush1.msra.mxu0 %v478
        %517 = vmatprep.subr.mxu0 0.0
        %518 = vmatpush1.msra.mxu0 %v477
        %519 = vmatprep.subr.mxu0 0.0
        %520 = vmatpush1.msra.mxu0 %v476
        %521 = vmatprep.subr.mxu0 0.0
        %522 = vmatpush1.msra.mxu0 %v475
        %523 = vmatprep.subr.mxu0 0.0
        %524 = vmatpush1.msra.mxu0 %v474
        %525 = vmatprep.subr.mxu0 0.0
        %526 = vmatpush2.msra.mxu0 0.0
        %527 = vmatprep.subr.mxu0 0.0
        %528 = vmatpush2.msra.mxu0 0.0
        %529 = vmatprep.subr.mxu0 0.0
        %530 = vmatpush2.msra.mxu0 0.0
        %531 = vmatprep.subr.mxu0 0.0
        %532 = vmatpush2.msra.mxu0 0.0
        %533 = vmatprep.subr.mxu0 0.0
        %534 = vmatpush2.msra.mxu0 0.0
        %535 = vmatprep.subr.mxu0 0.0
        %536 = vmatpush2.msra.mxu0 0.0
        %537 = vmatprep.subr.mxu0 0.0
        %538 = vmatpush2.msra.mxu0 0.0
        %539 = vmatprep.subr.mxu0 0.0
        %540 = vmatpush2.msra.mxu0 0.0
        %541 = vmatprep.subr.mxu0 0.0
        %542 = vmatpush2.msra.mxu0 0.0
        %543 = vmatprep.subr.mxu0 0.0
        %544 = vmatpush2.msra.mxu0 0.0
        %545 = vmatprep.subr.mxu0 0.0
        %546 = vmatpush2.msra.mxu0 0.0
        %547 = vmatprep.subr.mxu0 0.0
        %548 = vmatpush2.msra.mxu0 0.0
        %549 = vmatprep.subr.mxu0 0.0
        %550 = vmatpush2.msra.mxu0 0.0
        %551 = vmatprep.subr.mxu0 0.0
        %552 = vmatpush2.msra.mxu0 0.0
        %553 = vmatprep.subr.mxu0 0.0
        %554 = vmatpush2.msra.mxu0 0.0
        %555 = vmatprep.subr.mxu0 0.0
        %556 = vmatpush2.msra.mxu0 0.0
        %557 = vmatprep.mubr.f32.mxu0 0.0
        %558 = vmatmul.mubr.f32.gmra.mxu0 %v491
        %v559 = vpop.f32.mrf.mxu0
        %v560 = vadd.f32 %v487, %v559
        %v561 = vpop.f32.mrf.mxu0
        %562 = vdwg.mxu0
        %v563 = vsel %vm319, %v560, -inf
        %564 = vmax.xlane.f32.xlu0 %v563
        %v565 = vpop.xlane.xlu0 %564
        %v566 = vsub.f32 %v560, %v565
        %v567 = vmul.f32 %v566, 1.442695
        %v568 = vpow.pop %v567
        %v569 = vsel %vm319, %v568, 0.0
        %570 = vadd.xlane.f32.xlu0 %v569
        %v571 = vpop.xlane.xlu0 %570
        %v572 = vlog2.pop %v571
        %v573 = vmul.f32 %v572, 0.6931472
        %574 = vst.msk [vmem:[#allocation2] sm:$0xff] %vm319, %v473
        %v575 = vsub.f32 %v566, %v573
        %576 = vst.msk [vmem:[%s297] sm:$0xff] %vm319, %v575
        %577 = vrot.lane.b32.xlu0 %v473, 32
        %v578 = vpop.permute.xlu0 %577
        %vm580 = vcmask 523520
        %581 = vst.msk [vmem:[%s297] sm:$0xff] %vm580, %v578
        %s582 = sand.u32 %s183, 1
        %s583 = scalar_lea.sflag [#allocation5], %s582
        %s584 = sand.u32 %s183, 1
        %s585 = smul.addr %s584, 8
        %s586 = scalar_lea.vmem [#allocation8], %s585
        // Predicated region
        $region61: #{tpu_custom_call.1} parent=47 // pred_check
          %p587 = pneg %p193
        $region62: #{tpu_custom_call.1} parent=47 // pred_check_branch
          %589 = sbr.rel (%p587) target = $region64
        $region63: #{tpu_custom_call.1} parent=47 // pred_region
          %s591 = ssub.s32 128, 128
          %592 = vsyncadd %s583, %s591
          %s593 = smul.addr %s23, 128
          %s594 = scalar_lea.hbm %s7, %s593
          %s596 = sshll.u32 %s586, 4
          %s597 = int_to_ptr.vmem [resolvable:$true] %s596
          %599 = dma.vmem_to_hbm [thread:$0]  %s597, 128, %s594, %s583
        $region64: #{tpu_custom_call.1} parent=47 // pred_fallthru
          _
      $region48: #{tpu_custom_call.1} parent=5 // pred_fallthru
        _
      %p600 = scmp.le.s32.totalorder 2, %s18
      // Predicated region
      $region65: #{tpu_custom_call.1} parent=5 // pred_check
        %p601 = pneg %p600
      $region66: #{tpu_custom_call.1} parent=5 // pred_check_branch
        %603 = sbr.rel (%p601) target = $region68
      $region67: #{tpu_custom_call.1} parent=5 // pred_region
        %s604 = ssub.s32 %s18, 2
        // Predicated region
        $region69: #{tpu_custom_call.1} parent=67 // pred_check
          %p605 = pneg %p199
        $region70: #{tpu_custom_call.1} parent=67 // pred_check_branch
          %607 = sbr.rel (%p605) target = $region72
        $region71: #{tpu_custom_call.1} parent=67 // pred_region
          %s608 = sand.u32 %s184, 1
          %s609 = scalar_lea.sflag [#allocation5], %s608
          %s610 = sand.u32 %s184, 1
          %s611 = smul.addr %s610, 8
          %s612 = scalar_lea.vmem [#allocation8], %s611
          %613 = dma.done %s609, 128
        $region72: #{tpu_custom_call.1} parent=67 // pred_fallthru
          _
      $region68: #{tpu_custom_call.1} parent=5 // pred_fallthru
        _
    $region6: #{tpu_custom_call.1} parent=1 // loop_footer
      %s22 = sadd.s32 1, %s18
    $region7: #{tpu_custom_call.1} parent=1 // loop_footer_branch
      %17 = sbr.rel target = $region3
    $region8: #{tpu_custom_call.1} parent=1 // loop_exit
      _
    %614 = vsyncpa [#allocation4], 1
    %s615 = scalar_lea.sflag [#allocation4], 1
    %616 = vsyncpa %s615, 1
    %617 = vsyncpa [#allocation7], 1
    %618 = vsyncpa [#allocation5], 1
    %s619 = scalar_lea.sflag [#allocation5], 1
    %620 = vsyncpa %s619, 1

</llo_original>
